<compile_context>
chip_gen: v7x
topology: tpu7x:2x2x1
jax: 0.10.0
libtpu: 0.0.40
codegen_flags: <defaults>
</compile_context>

<pallas_src>
import jax
import jax.numpy as jnp
from jax.experimental import pallas as pl
from jax.experimental.pallas import tpu as pltpu


# ----------------------------- fused Pallas kernel ---------------------------

def _fused_forward_kernel(x_ref, a_ref, gcnw_ref, gcnb_ref,
                          fcw1_ref, fcw2_ref, fcw3_ref, fcb_ref, o_ref):
    """Whole SubModel forward in one invocation (everything VMEM-resident).

    Packed inputs:
      x_ref    : (N, F)        bf16  node features
      a_ref    : (3N, 3N)      bf16  blockdiag(A_hat1, A_hat2, A_hat3)
      gcnw_ref : (2, F, 3F)    bf16  [W1_0|W1_1|W1_2], [W2_0|W2_1|W2_2]
      gcnb_ref : (2, 3N, F)    f32   per-branch GCN biases, row-expanded
      fcw1_ref : (2, F, 256)   bf16  linear1.w1, linear2.w1
      fcw2_ref : (2, 256, 128) bf16
      fcw3_ref : (2, 128, 64)  bf16
      fcb_ref  : (2, 3, 256)   f32   FC biases, lane-padded to 256
    Output:
      o_ref    : (N, 256)      f32   [ Xsum | X1 | X2 | X3 ] (64 lanes each)
    """
    x = x_ref[...]                      # (N, F) bf16
    n, f = x.shape
    a_blk = a_ref[...]                  # (3N, 3N) bf16

    def fc_chain(h, layer):
        # Linear+ReLU x3 (Dropout(p=0) == identity).  Matmuls in bf16 on the
        # MXU with f32 accumulation; bias add + ReLU stay f32 on the VPU.
        b = fcb_ref[layer]              # (3, 256) f32
        h = jnp.dot(h.astype(jnp.bfloat16), fcw1_ref[layer],
                    preferred_element_type=jnp.float32)
        h = jnp.maximum(h + b[0:1, 0:256], 0.0)
        h = jnp.dot(h.astype(jnp.bfloat16), fcw2_ref[layer],
                    preferred_element_type=jnp.float32)
        h = jnp.maximum(h + b[1:2, 0:128], 0.0)
        h = jnp.dot(h.astype(jnp.bfloat16), fcw3_ref[layer],
                    preferred_element_type=jnp.float32)
        h = jnp.maximum(h + b[2:3, 0:64], 0.0)
        return h                        # (rows, 64) f32

    # ---------------- three GCN branches, fused ----------------
    # Layer 1: one (N,F)@(F,3F) transform for all branches, then one
    # block-diagonal aggregation matmul instead of three tiny A_b matmuls.
    t1 = jnp.dot(x, gcnw_ref[0], preferred_element_type=jnp.float32)    # (N, 3F)
    t1_rows = jnp.concatenate(                                           # (3N, F)
        [t1[:, 0:f], t1[:, f:2 * f], t1[:, 2 * f:3 * f]], axis=0)
    z1 = jnp.dot(a_blk, t1_rows.astype(jnp.bfloat16),
                 preferred_element_type=jnp.float32)                     # (3N, F)
    z1 = jnp.maximum(z1 + gcnb_ref[0], 0.0)

    # Layer 2: (3N,F)@(F,3F); keep only the per-branch diagonal blocks, then
    # one block-diag aggregation matmul.
    t2 = jnp.dot(z1.astype(jnp.bfloat16), gcnw_ref[1],
                 preferred_element_type=jnp.float32)                     # (3N, 3F)
    t2_rows = jnp.concatenate(                                           # (3N, F)
        [t2[0:n, 0:f], t2[n:2 * n, f:2 * f], t2[2 * n:3 * n, 2 * f:3 * f]],
        axis=0)
    z2 = jnp.dot(a_blk, t2_rows.astype(jnp.bfloat16),
                 preferred_element_type=jnp.float32)                     # (3N, F)
    z2 = jnp.maximum(z2 + gcnb_ref[1], 0.0)

    # Shared FullConnectedLayer (linear2) once over the row-stacked branches;
    # FullConnectedLayer (linear1) on the raw features.
    y = fc_chain(z2, 1)                 # (3N, 64)
    x0 = fc_chain(x, 0)                 # (N, 64)

    x1 = y[0:n, :]
    x2 = y[n:2 * n, :]
    x3 = y[2 * n:3 * n, :]

    # Direct lane-slice stores into the (N, 256) output slab (no lane concat).
    o_ref[:, 0:64] = x0 + x1 + x2 + x3
    o_ref[:, 64:128] = x1
    o_ref[:, 128:192] = x2
    o_ref[:, 192:256] = x3


# ------------------------------ forward wrapper ------------------------------

def sub_model_forward(X, a1, a2, a3, params):
    n, f = X.shape
    bf16 = jnp.bfloat16
    mods = [params["model1"], params["model2"], params["model3"]]

    # Packed kernel inputs (8 DMAs instead of 18).
    x_bf = X.astype(bf16)

    zero_nn = jnp.zeros((n, n), jnp.float32)
    a_blk = jnp.concatenate([
        jnp.concatenate([a1, zero_nn, zero_nn], axis=1),
        jnp.concatenate([zero_nn, a2, zero_nn], axis=1),
        jnp.concatenate([zero_nn, zero_nn, a3], axis=1),
    ], axis=0).astype(bf16)                                            # (3N, 3N)

    w1_cat = jnp.concatenate([p["w1"] for p in mods], axis=1)          # (F, 3F)
    w2_cat = jnp.concatenate([p["w2"] for p in mods], axis=1)          # (F, 3F)
    gcn_w = jnp.stack([w1_cat, w2_cat]).astype(bf16)                   # (2, F, 3F)

    def expand_rows(bs):   # three (F,) biases -> (3N, F) row-stacked
        return jnp.concatenate(
            [jnp.broadcast_to(b[None, :], (n, f)) for b in bs], axis=0)
    gcn_b = jnp.stack([expand_rows([p["b1"] for p in mods]),
                       expand_rows([p["b2"] for p in mods])])          # (2, 3N, F)

    l1, l2 = params["linear1"], params["linear2"]
    fc_w1 = jnp.stack([l1["w1"], l2["w1"]]).astype(bf16)               # (2, F, 256)
    fc_w2 = jnp.stack([l1["w2"], l2["w2"]]).astype(bf16)               # (2, 256, 128)
    fc_w3 = jnp.stack([l1["w3"], l2["w3"]]).astype(bf16)               # (2, 128, 64)

    def pad_lane(v, width=256):
        return jnp.pad(v, (0, width - v.shape[0]))
    fc_b = jnp.stack([
        jnp.stack([pad_lane(l["b1"]), pad_lane(l["b2"]), pad_lane(l["b3"])])
        for l in (l1, l2)
    ])                                                                  # (2, 3, 256)

    args = (x_bf, a_blk, gcn_w, gcn_b, fc_w1, fc_w2, fc_w3, fc_b)

    fc_cols = f * 256 + 256 * 128 + 128 * 64
    flops = (2 * n * f * (3 * f)              # X @ W1_cat
             + 2 * (3 * n) * (3 * n) * f      # A_blk @ t1_rows
             + 2 * (3 * n) * f * (3 * f)      # Z1 @ W2_cat
             + 2 * (3 * n) * (3 * n) * f      # A_blk @ t2_rows
             + 2 * n * fc_cols                # linear1
             + 2 * (3 * n) * fc_cols)         # linear2 over stacked branches
    bytes_accessed = (sum(int(a.size) * a.dtype.itemsize for a in args)
                      + n * 256 * 4)

    out = pl.pallas_call(
        _fused_forward_kernel,
        out_shape=jax.ShapeDtypeStruct((n, 4 * 64), jnp.float32),
        in_specs=[pl.BlockSpec(memory_space=pltpu.MemorySpace.VMEM)] * len(args),
        out_specs=pl.BlockSpec(memory_space=pltpu.MemorySpace.VMEM),
        cost_estimate=pl.CostEstimate(
            flops=flops, transcendentals=0, bytes_accessed=bytes_accessed),
    )(*args)

    xsum = out[:, 0:64]
    x1 = out[:, 64:128]
    x2 = out[:, 128:192]
    x3 = out[:, 192:256]
    return xsum, x1, x2, x3


# ------------------------------ plain-JAX pieces ------------------------------

def gcn_normalize(adj_weighted):
    """Symmetric GCN normalization with self loops: D^-1/2 (A + I) D^-1/2."""
    n = adj_weighted.shape[0]
    a = adj_weighted + jnp.eye(n, dtype=adj_weighted.dtype)
    deg = jnp.sum(a, axis=1)
    dinv = jnp.where(deg > 0, jax.lax.rsqrt(deg), 0.0)
    return dinv[:, None] * a * dinv[None, :]


def _reference_forward(X, a1, a2, a3, params, matmul_dtype=jnp.float32):
    """Pure-JAX reference (same math, un-fused).  matmul_dtype=bf16 mirrors the
    kernel's MXU operand cast (f32 accumulation either way)."""
    def dot(a, b):
        return jnp.dot(a.astype(matmul_dtype), b.astype(matmul_dtype),
                       preferred_element_type=jnp.float32)

    def fc(x, p):
        x = jnp.maximum(dot(x, p["w1"]) + p["b1"], 0.0)
        x = jnp.maximum(dot(x, p["w2"]) + p["b2"], 0.0)
        x = jnp.maximum(dot(x, p["w3"]) + p["b3"], 0.0)
        return x

    def gcn2(x, a, p):
        x = jnp.maximum(dot(a, dot(x, p["w1"])) + p["b1"], 0.0)
        x = jnp.maximum(dot(a, dot(x, p["w2"])) + p["b2"], 0.0)
        return x

    X0 = fc(X, params["linear1"])
    X1 = fc(gcn2(X, a1, params["model1"]), params["linear2"])
    X2 = fc(gcn2(X, a2, params["model2"]), params["linear2"])
    X3 = fc(gcn2(X, a3, params["model3"]), params["linear2"])
    return X0 + X1 + X2 + X3, X1, X2, X3


# --------------------------- deterministic params ----------------------------

def _linear_init(key, fan_in, fan_out):
    kw, kb = jax.random.split(key)
    bound = 1.0 / jnp.sqrt(fan_in)
    w = jax.random.uniform(kw, (fan_in, fan_out), jnp.float32, -bound, bound)
    b = jax.random.uniform(kb, (fan_out,), jnp.float32, -bound, bound)
    return w, b


def make_params(key, feat):
    keys = jax.random.split(key, 12)
    params = {}
    # three SingleModules: gcn1/gcn2 weights (F,F) + biases (F,)
    for i, name in enumerate(["model1", "model2", "model3"]):
        w1, b1 = _linear_init(keys[2 * i], feat, feat)
        w2, b2 = _linear_init(keys[2 * i + 1], feat, feat)
        params[name] = {"w1": w1, "b1": b1, "w2": w2, "b2": b2}
    # two FullConnectedLayers: F->256->128->64
    for j, name in enumerate(["linear1", "linear2"]):
        base = 6 + 3 * j
        w1, b1 = _linear_init(keys[base + 0], feat, 256)
        w2, b2 = _linear_init(keys[base + 1], 256, 128)
        w3, b3 = _linear_init(keys[base + 2], 128, 64)
        params[name] = {"w1": w1, "b1": b1, "w2": w2, "b2": b2,
                        "w3": w3, "b3": b3}
    return params


def make_graph(key, n):
    """Deterministic random weighted undirected graph as a dense (N, N) matrix."""
    kw, km = jax.random.split(key)
    w = jax.random.uniform(kw, (n, n), jnp.float32, 0.0, 1.0)
    mask = (jax.random.uniform(km, (n, n)) < 0.4).astype(jnp.float32)
    a = w * mask
    a = 0.5 * (a + a.T)                        # symmetrize
    a = a * (1.0 - jnp.eye(n, dtype=a.dtype))  # self loops added in normalization
    return a


# ---------------------------------- main --------------------------------------

if __name__ == "__main__":
    N, F = 16, 32  # small synthetic shapes: 16 nodes, 32 features per node

    key = jax.random.PRNGKey(0)
    k_x, k_g1, k_g2, k_g3, k_p = jax.random.split(key, 5)

    X = jax.random.normal(k_x, (N, F), jnp.float32)
    a1 = gcn_normalize(make_graph(k_g1, N))
    a2 = gcn_normalize(make_graph(k_g2, N))
    a3 = gcn_normalize(make_graph(k_g3, N))
    params = make_params(k_p, F)

    fwd = jax.jit(sub_model_forward)
    Xsum, X1, X2, X3 = fwd(X, a1, a2, a3, params)
    jax.block_until_ready((Xsum, X1, X2, X3))

    assert Xsum.shape == (N, 64) and X1.shape == (N, 64)
    assert X2.shape == (N, 64) and X3.shape == (N, 64)

    # Tight check vs a reference doing the same bf16-operand / f32-accumulate math.
    ref_bf16 = jax.jit(
        lambda X, a1, a2, a3, p: _reference_forward(X, a1, a2, a3, p, jnp.bfloat16))
    rs, r1, r2, r3 = ref_bf16(X, a1, a2, a3, params)
    for got, ref in ((Xsum, rs), (X1, r1), (X2, r2), (X3, r3)):
        assert bool(jnp.allclose(got, ref, rtol=1e-2, atol=1e-2)), \
            "mismatch vs bf16-matched reference"

    # Looser sanity check vs the full-f32 reference (bf16 MXU cast tolerance).
    fs, f1, f2, f3 = jax.jit(_reference_forward)(X, a1, a2, a3, params)
    for got, ref in ((Xsum, fs), (X1, f1), (X2, f2), (X3, f3)):
        assert bool(jnp.allclose(got, ref, rtol=5e-2, atol=5e-2)), \
            "mismatch vs f32 reference"

    print("KERNEL_OK")
</pallas_src>

<mosaic_0001>
module attributes {stable_mosaic.version = 11 : i64} {
  func.func @_fused_forward_kernel(%arg0: memref<16x32xbf16, #tpu.memory_space<vmem>>, %arg1: memref<48x48xbf16, #tpu.memory_space<vmem>>, %arg2: memref<2x32x96xbf16, #tpu.memory_space<vmem>>, %arg3: memref<2x48x32xf32, #tpu.memory_space<vmem>>, %arg4: memref<2x32x256xbf16, #tpu.memory_space<vmem>>, %arg5: memref<2x256x128xbf16, #tpu.memory_space<vmem>>, %arg6: memref<2x128x64xbf16, #tpu.memory_space<vmem>>, %arg7: memref<2x3x256xf32, #tpu.memory_space<vmem>>, %arg8: memref<16x256xf32, #tpu.memory_space<vmem>>) attributes {dimension_semantics = [], scalar_prefetch = 0 : i64, scratch_operands = 0 : i64, tpu.core_type = #tpu.core_type<tc>} {
    %c0 = arith.constant 0 : index
    %c0_0 = arith.constant 0 : index
    %0 = vector.load %arg0[%c0, %c0_0] : memref<16x32xbf16, #tpu.memory_space<vmem>>, vector<16x32xbf16>
    %c0_1 = arith.constant 0 : index
    %c0_2 = arith.constant 0 : index
    %1 = vector.load %arg1[%c0_1, %c0_2] : memref<48x48xbf16, #tpu.memory_space<vmem>>, vector<48x48xbf16>
    %c0_3 = arith.constant 0 : index
    %c0_4 = arith.constant 0 : index
    %c0_5 = arith.constant 0 : index
    %2 = vector.load %arg2[%c0_3, %c0_4, %c0_5] : memref<2x32x96xbf16, #tpu.memory_space<vmem>>, vector<1x32x96xbf16>
    %3 = vector.shape_cast %2 : vector<1x32x96xbf16> to vector<32x96xbf16>
    %cst = arith.constant dense<0.000000e+00> : vector<16x96xf32>
    %4 = tpu.matmul %0, %3, %cst {dimension_numbers = #tpu.dot_dimension_numbers<[1], [0], [0], [1], [0, 0, 1, 1], [], []>} : vector<16x32xbf16>, vector<32x96xbf16>, vector<16x96xf32> -> vector<16x96xf32>
    %5 = vector.extract_strided_slice %4 {offsets = [0, 0], sizes = [16, 32], strides = [1, 1]} : vector<16x96xf32> to vector<16x32xf32>
    %6 = vector.extract_strided_slice %4 {offsets = [0, 32], sizes = [16, 32], strides = [1, 1]} : vector<16x96xf32> to vector<16x32xf32>
    %7 = vector.extract_strided_slice %4 {offsets = [0, 64], sizes = [16, 32], strides = [1, 1]} : vector<16x96xf32> to vector<16x32xf32>
    %8 = tpu.concatenate %5, %6, %7 in 0 : vector<16x32xf32>, vector<16x32xf32>, vector<16x32xf32> -> vector<48x32xf32>
    %9 = arith.truncf %8 : vector<48x32xf32> to vector<48x32xbf16>
    %cst_6 = arith.constant dense<0.000000e+00> : vector<48x32xf32>
    %10 = tpu.matmul %1, %9, %cst_6 {dimension_numbers = #tpu.dot_dimension_numbers<[1], [0], [0], [1], [0, 0, 1, 1], [], []>} : vector<48x48xbf16>, vector<48x32xbf16>, vector<48x32xf32> -> vector<48x32xf32>
    %c0_7 = arith.constant 0 : index
    %c0_8 = arith.constant 0 : index
    %c0_9 = arith.constant 0 : index
    %11 = vector.load %arg3[%c0_7, %c0_8, %c0_9] : memref<2x48x32xf32, #tpu.memory_space<vmem>>, vector<1x48x32xf32>
    %12 = vector.shape_cast %11 : vector<1x48x32xf32> to vector<48x32xf32>
    %13 = arith.addf %10, %12 : vector<48x32xf32>
    %cst_10 = arith.constant 0.000000e+00 : f32
    %14 = vector.broadcast %cst_10 : f32 to vector<48x32xf32>
    %15 = arith.maximumf %13, %14 : vector<48x32xf32>
    %16 = arith.truncf %15 : vector<48x32xf32> to vector<48x32xbf16>
    %c1 = arith.constant 1 : index
    %c0_11 = arith.constant 0 : index
    %c0_12 = arith.constant 0 : index
    %17 = vector.load %arg2[%c1, %c0_11, %c0_12] : memref<2x32x96xbf16, #tpu.memory_space<vmem>>, vector<1x32x96xbf16>
    %18 = vector.shape_cast %17 : vector<1x32x96xbf16> to vector<32x96xbf16>
    %cst_13 = arith.constant dense<0.000000e+00> : vector<48x96xf32>
    %19 = tpu.matmul %16, %18, %cst_13 {dimension_numbers = #tpu.dot_dimension_numbers<[1], [0], [0], [1], [0, 0, 1, 1], [], []>} : vector<48x32xbf16>, vector<32x96xbf16>, vector<48x96xf32> -> vector<48x96xf32>
    %20 = vector.extract_strided_slice %19 {offsets = [0, 0], sizes = [16, 32], strides = [1, 1]} : vector<48x96xf32> to vector<16x32xf32>
    %21 = vector.extract_strided_slice %19 {offsets = [16, 32], sizes = [16, 32], strides = [1, 1]} : vector<48x96xf32> to vector<16x32xf32>
    %22 = vector.extract_strided_slice %19 {offsets = [32, 64], sizes = [16, 32], strides = [1, 1]} : vector<48x96xf32> to vector<16x32xf32>
    %23 = tpu.concatenate %20, %21, %22 in 0 : vector<16x32xf32>, vector<16x32xf32>, vector<16x32xf32> -> vector<48x32xf32>
    %24 = arith.truncf %23 : vector<48x32xf32> to vector<48x32xbf16>
    %cst_14 = arith.constant dense<0.000000e+00> : vector<48x32xf32>
    %25 = tpu.matmul %1, %24, %cst_14 {dimension_numbers = #tpu.dot_dimension_numbers<[1], [0], [0], [1], [0, 0, 1, 1], [], []>} : vector<48x48xbf16>, vector<48x32xbf16>, vector<48x32xf32> -> vector<48x32xf32>
    %c1_15 = arith.constant 1 : index
    %c0_16 = arith.constant 0 : index
    %c0_17 = arith.constant 0 : index
    %26 = vector.load %arg3[%c1_15, %c0_16, %c0_17] : memref<2x48x32xf32, #tpu.memory_space<vmem>>, vector<1x48x32xf32>
    %27 = vector.shape_cast %26 : vector<1x48x32xf32> to vector<48x32xf32>
    %28 = arith.addf %25, %27 : vector<48x32xf32>
    %cst_18 = arith.constant 0.000000e+00 : f32
    %29 = vector.broadcast %cst_18 : f32 to vector<48x32xf32>
    %30 = arith.maximumf %28, %29 : vector<48x32xf32>
    %c1_19 = arith.constant 1 : index
    %c0_20 = arith.constant 0 : index
    %c0_21 = arith.constant 0 : index
    %31 = vector.load %arg7[%c1_19, %c0_20, %c0_21] : memref<2x3x256xf32, #tpu.memory_space<vmem>>, vector<1x3x256xf32>
    %32 = vector.shape_cast %31 : vector<1x3x256xf32> to vector<3x256xf32>
    %33 = arith.truncf %30 : vector<48x32xf32> to vector<48x32xbf16>
    %c1_22 = arith.constant 1 : index
    %c0_23 = arith.constant 0 : index
    %c0_24 = arith.constant 0 : index
    %34 = vector.load %arg4[%c1_22, %c0_23, %c0_24] : memref<2x32x256xbf16, #tpu.memory_space<vmem>>, vector<1x32x256xbf16>
    %35 = vector.shape_cast %34 : vector<1x32x256xbf16> to vector<32x256xbf16>
    %cst_25 = arith.constant dense<0.000000e+00> : vector<48x256xf32>
    %36 = tpu.matmul %33, %35, %cst_25 {dimension_numbers = #tpu.dot_dimension_numbers<[1], [0], [0], [1], [0, 0, 1, 1], [], []>} : vector<48x32xbf16>, vector<32x256xbf16>, vector<48x256xf32> -> vector<48x256xf32>
    %37 = vector.extract_strided_slice %32 {offsets = [0, 0], sizes = [1, 256], strides = [1, 1]} : vector<3x256xf32> to vector<1x256xf32>
    %38 = vector.broadcast %37 : vector<1x256xf32> to vector<48x256xf32>
    %39 = arith.addf %36, %38 : vector<48x256xf32>
    %cst_26 = arith.constant 0.000000e+00 : f32
    %40 = vector.broadcast %cst_26 : f32 to vector<48x256xf32>
    %41 = arith.maximumf %39, %40 : vector<48x256xf32>
    %42 = arith.truncf %41 : vector<48x256xf32> to vector<48x256xbf16>
    %c1_27 = arith.constant 1 : index
    %c0_28 = arith.constant 0 : index
    %c0_29 = arith.constant 0 : index
    %43 = vector.load %arg5[%c1_27, %c0_28, %c0_29] : memref<2x256x128xbf16, #tpu.memory_space<vmem>>, vector<1x256x128xbf16>
    %44 = vector.shape_cast %43 : vector<1x256x128xbf16> to vector<256x128xbf16>
    %cst_30 = arith.constant dense<0.000000e+00> : vector<48x128xf32>
    %45 = tpu.matmul %42, %44, %cst_30 {dimension_numbers = #tpu.dot_dimension_numbers<[1], [0], [0], [1], [0, 0, 1, 1], [], []>} : vector<48x256xbf16>, vector<256x128xbf16>, vector<48x128xf32> -> vector<48x128xf32>
    %46 = vector.extract_strided_slice %32 {offsets = [1, 0], sizes = [1, 128], strides = [1, 1]} : vector<3x256xf32> to vector<1x128xf32>
    %47 = vector.broadcast %46 : vector<1x128xf32> to vector<48x128xf32>
    %48 = arith.addf %45, %47 : vector<48x128xf32>
    %cst_31 = arith.constant 0.000000e+00 : f32
    %49 = vector.broadcast %cst_31 : f32 to vector<48x128xf32>
    %50 = arith.maximumf %48, %49 : vector<48x128xf32>
    %51 = arith.truncf %50 : vector<48x128xf32> to vector<48x128xbf16>
    %c1_32 = arith.constant 1 : index
    %c0_33 = arith.constant 0 : index
    %c0_34 = arith.constant 0 : index
    %52 = vector.load %arg6[%c1_32, %c0_33, %c0_34] : memref<2x128x64xbf16, #tpu.memory_space<vmem>>, vector<1x128x64xbf16>
    %53 = vector.shape_cast %52 : vector<1x128x64xbf16> to vector<128x64xbf16>
    %cst_35 = arith.constant dense<0.000000e+00> : vector<48x64xf32>
    %54 = tpu.matmul %51, %53, %cst_35 {dimension_numbers = #tpu.dot_dimension_numbers<[1], [0], [0], [1], [0, 0, 1, 1], [], []>} : vector<48x128xbf16>, vector<128x64xbf16>, vector<48x64xf32> -> vector<48x64xf32>
    %55 = vector.extract_strided_slice %32 {offsets = [2, 0], sizes = [1, 64], strides = [1, 1]} : vector<3x256xf32> to vector<1x64xf32>
    %56 = vector.broadcast %55 : vector<1x64xf32> to vector<48x64xf32>
    %57 = arith.addf %54, %56 : vector<48x64xf32>
    %cst_36 = arith.constant 0.000000e+00 : f32
    %58 = vector.broadcast %cst_36 : f32 to vector<48x64xf32>
    %59 = arith.maximumf %57, %58 : vector<48x64xf32>
    %c0_37 = arith.constant 0 : index
    %c0_38 = arith.constant 0 : index
    %c0_39 = arith.constant 0 : index
    %60 = vector.load %arg7[%c0_37, %c0_38, %c0_39] : memref<2x3x256xf32, #tpu.memory_space<vmem>>, vector<1x3x256xf32>
    %61 = vector.shape_cast %60 : vector<1x3x256xf32> to vector<3x256xf32>
    %c0_40 = arith.constant 0 : index
    %c0_41 = arith.constant 0 : index
    %c0_42 = arith.constant 0 : index
    %62 = vector.load %arg4[%c0_40, %c0_41, %c0_42] : memref<2x32x256xbf16, #tpu.memory_space<vmem>>, vector<1x32x256xbf16>
    %63 = vector.shape_cast %62 : vector<1x32x256xbf16> to vector<32x256xbf16>
    %cst_43 = arith.constant dense<0.000000e+00> : vector<16x256xf32>
    %64 = tpu.matmul %0, %63, %cst_43 {dimension_numbers = #tpu.dot_dimension_numbers<[1], [0], [0], [1], [0, 0, 1, 1], [], []>} : vector<16x32xbf16>, vector<32x256xbf16>, vector<16x256xf32> -> vector<16x256xf32>
    %65 = vector.extract_strided_slice %61 {offsets = [0, 0], sizes = [1, 256], strides = [1, 1]} : vector<3x256xf32> to vector<1x256xf32>
    %66 = vector.broadcast %65 : vector<1x256xf32> to vector<16x256xf32>
    %67 = arith.addf %64, %66 : vector<16x256xf32>
    %cst_44 = arith.constant 0.000000e+00 : f32
    %68 = vector.broadcast %cst_44 : f32 to vector<16x256xf32>
    %69 = arith.maximumf %67, %68 : vector<16x256xf32>
    %70 = arith.truncf %69 : vector<16x256xf32> to vector<16x256xbf16>
    %c0_45 = arith.constant 0 : index
    %c0_46 = arith.constant 0 : index
    %c0_47 = arith.constant 0 : index
    %71 = vector.load %arg5[%c0_45, %c0_46, %c0_47] : memref<2x256x128xbf16, #tpu.memory_space<vmem>>, vector<1x256x128xbf16>
    %72 = vector.shape_cast %71 : vector<1x256x128xbf16> to vector<256x128xbf16>
    %cst_48 = arith.constant dense<0.000000e+00> : vector<16x128xf32>
    %73 = tpu.matmul %70, %72, %cst_48 {dimension_numbers = #tpu.dot_dimension_numbers<[1], [0], [0], [1], [0, 0, 1, 1], [], []>} : vector<16x256xbf16>, vector<256x128xbf16>, vector<16x128xf32> -> vector<16x128xf32>
    %74 = vector.extract_strided_slice %61 {offsets = [1, 0], sizes = [1, 128], strides = [1, 1]} : vector<3x256xf32> to vector<1x128xf32>
    %75 = vector.broadcast %74 : vector<1x128xf32> to vector<16x128xf32>
    %76 = arith.addf %73, %75 : vector<16x128xf32>
    %cst_49 = arith.constant 0.000000e+00 : f32
    %77 = vector.broadcast %cst_49 : f32 to vector<16x128xf32>
    %78 = arith.maximumf %76, %77 : vector<16x128xf32>
    %79 = arith.truncf %78 : vector<16x128xf32> to vector<16x128xbf16>
    %c0_50 = arith.constant 0 : index
    %c0_51 = arith.constant 0 : index
    %c0_52 = arith.constant 0 : index
    %80 = vector.load %arg6[%c0_50, %c0_51, %c0_52] : memref<2x128x64xbf16, #tpu.memory_space<vmem>>, vector<1x128x64xbf16>
    %81 = vector.shape_cast %80 : vector<1x128x64xbf16> to vector<128x64xbf16>
    %cst_53 = arith.constant dense<0.000000e+00> : vector<16x64xf32>
    %82 = tpu.matmul %79, %81, %cst_53 {dimension_numbers = #tpu.dot_dimension_numbers<[1], [0], [0], [1], [0, 0, 1, 1], [], []>} : vector<16x128xbf16>, vector<128x64xbf16>, vector<16x64xf32> -> vector<16x64xf32>
    %83 = vector.extract_strided_slice %61 {offsets = [2, 0], sizes = [1, 64], strides = [1, 1]} : vector<3x256xf32> to vector<1x64xf32>
    %84 = vector.broadcast %83 : vector<1x64xf32> to vector<16x64xf32>
    %85 = arith.addf %82, %84 : vector<16x64xf32>
    %cst_54 = arith.constant 0.000000e+00 : f32
    %86 = vector.broadcast %cst_54 : f32 to vector<16x64xf32>
    %87 = arith.maximumf %85, %86 : vector<16x64xf32>
    %88 = vector.extract_strided_slice %59 {offsets = [0, 0], sizes = [16, 64], strides = [1, 1]} : vector<48x64xf32> to vector<16x64xf32>
    %89 = vector.extract_strided_slice %59 {offsets = [16, 0], sizes = [16, 64], strides = [1, 1]} : vector<48x64xf32> to vector<16x64xf32>
    %90 = vector.extract_strided_slice %59 {offsets = [32, 0], sizes = [16, 64], strides = [1, 1]} : vector<48x64xf32> to vector<16x64xf32>
    %91 = arith.addf %87, %88 : vector<16x64xf32>
    %92 = arith.addf %91, %89 : vector<16x64xf32>
    %93 = arith.addf %92, %90 : vector<16x64xf32>
    %c0_55 = arith.constant 0 : index
    %c0_56 = arith.constant 0 : index
    %94 = vector.load %arg8[%c0_55, %c0_56] : memref<16x256xf32, #tpu.memory_space<vmem>>, vector<16x64xf32>
    tpu.vector_store %arg8[%c0_55, %c0_56], %93 {strides = array<i32>} : memref<16x256xf32, #tpu.memory_space<vmem>>, vector<16x64xf32>,
    %c0_57 = arith.constant 0 : index
    %c64 = arith.constant 64 : index
    %95 = vector.load %arg8[%c0_57, %c64] : memref<16x256xf32, #tpu.memory_space<vmem>>, vector<16x64xf32>
    tpu.vector_store %arg8[%c0_57, %c64], %88 {strides = array<i32>} : memref<16x256xf32, #tpu.memory_space<vmem>>, vector<16x64xf32>,
    %c0_58 = arith.constant 0 : index
    %c128 = arith.constant 128 : index
    %96 = vector.load %arg8[%c0_58, %c128] : memref<16x256xf32, #tpu.memory_space<vmem>>, vector<16x64xf32>
    tpu.vector_store %arg8[%c0_58, %c128], %89 {strides = array<i32>} : memref<16x256xf32, #tpu.memory_space<vmem>>, vector<16x64xf32>,
    %c0_59 = arith.constant 0 : index
    %c192 = arith.constant 192 : index
    %97 = vector.load %arg8[%c0_59, %c192] : memref<16x256xf32, #tpu.memory_space<vmem>>, vector<16x64xf32>
    tpu.vector_store %arg8[%c0_59, %c192], %90 {strides = array<i32>} : memref<16x256xf32, #tpu.memory_space<vmem>>, vector<16x64xf32>,
    return
  }
}

</mosaic_0001>

<llo_original>
// kernel: sub_model_forward.1
$region0: #{sub_model_forward.1}
  #allocation0 [shape = 'u32[]', space=smem, size = 0x4, offset = 0x4, fixed_abs, tag = 'smem constant byte address 0x4 - core index']
  #allocation1 [shape = 'u32[144,128]{1,0:T(1,128)}', space=vmem, size = 0x12000, scoped, tag = 'internal scratch']
  %s0 = inlined_call_operand.vmem [shape: bf16[16,32], index: 0, kind: input, shape index: {}]
  %s1 = inlined_call_operand.vmem [shape: bf16[48,48], index: 1, kind: input, shape index: {}]
  %s2 = inlined_call_operand.vmem [shape: bf16[2,32,96], index: 2, kind: input, shape index: {}]
  %s3 = inlined_call_operand.vmem [shape: f32[2,48,32], index: 3, kind: input, shape index: {}]
  %s4 = inlined_call_operand.vmem [shape: bf16[2,32,256], index: 4, kind: input, shape index: {}]
  %s5 = inlined_call_operand.vmem [shape: bf16[2,256,128], index: 5, kind: input, shape index: {}]
  %s6 = inlined_call_operand.vmem [shape: bf16[2,128,64], index: 6, kind: input, shape index: {}]
  %s7 = inlined_call_operand.vmem [shape: f32[2,3,256], index: 7, kind: input, shape index: {}]
  %s8 = inlined_call_operand.vmem [shape: f32[16,256], index: 8, kind: output, shape index: {}]
  %s9 = sld [smem:[#allocation0]]
  $region42: #{sub_model_forward.1} parent=0
    _
  %s11 = ssub.s32 1, %s9
  %s12 = scalar_select 0, %s11, %s9
  // Predicated region
  $region2: #{sub_model_forward.1} parent=0 // pred_check
    _
  $region3: #{sub_model_forward.1} parent=0 // pred_check_branch
    %14 = sbr.rel (0) target = $region5
  $region4: #{sub_model_forward.1} parent=0 // pred_region
    _
  $region5: #{sub_model_forward.1} parent=0 // pred_fallthru
    _
  // Predicated region
  $region6: #{sub_model_forward.1} parent=0 // pred_check
    _
  $region7: #{sub_model_forward.1} parent=0 // pred_check_branch
    %16 = sbr.rel (0) target = $region9
  $region8: #{sub_model_forward.1} parent=0 // pred_region
    _
  $region9: #{sub_model_forward.1} parent=0 // pred_fallthru
    _
  // Predicated region
  $region10: #{sub_model_forward.1} parent=0 // pred_check
    _
  $region11: #{sub_model_forward.1} parent=0 // pred_check_branch
    %18 = sbr.rel (0) target = $region13
  $region12: #{sub_model_forward.1} parent=0 // pred_region
    _
  $region13: #{sub_model_forward.1} parent=0 // pred_fallthru
    _
  // Predicated region
  $region14: #{sub_model_forward.1} parent=0 // pred_check
    _
  $region15: #{sub_model_forward.1} parent=0 // pred_check_branch
    %20 = sbr.rel (0) target = $region17
  $region16: #{sub_model_forward.1} parent=0 // pred_region
    _
  $region17: #{sub_model_forward.1} parent=0 // pred_fallthru
    _
  // Predicated region
  $region18: #{sub_model_forward.1} parent=0 // pred_check
    _
  $region19: #{sub_model_forward.1} parent=0 // pred_check_branch
    %22 = sbr.rel (0) target = $region21
  $region20: #{sub_model_forward.1} parent=0 // pred_region
    _
  $region21: #{sub_model_forward.1} parent=0 // pred_fallthru
    _
  // Predicated region
  $region22: #{sub_model_forward.1} parent=0 // pred_check
    _
  $region23: #{sub_model_forward.1} parent=0 // pred_check_branch
    %24 = sbr.rel (0) target = $region25
  $region24: #{sub_model_forward.1} parent=0 // pred_region
    _
  $region25: #{sub_model_forward.1} parent=0 // pred_fallthru
    _
  // Predicated region
  $region26: #{sub_model_forward.1} parent=0 // pred_check
    _
  $region27: #{sub_model_forward.1} parent=0 // pred_check_branch
    %26 = sbr.rel (0) target = $region29
  $region28: #{sub_model_forward.1} parent=0 // pred_region
    _
  $region29: #{sub_model_forward.1} parent=0 // pred_fallthru
    _
  // Predicated region
  $region30: #{sub_model_forward.1} parent=0 // pred_check
    _
  $region31: #{sub_model_forward.1} parent=0 // pred_check_branch
    %28 = sbr.rel (0) target = $region33
  $region32: #{sub_model_forward.1} parent=0 // pred_region
    _
  $region33: #{sub_model_forward.1} parent=0 // pred_fallthru
    _
  %v30 = vld [vmem:[%s0] sm:$0xf]
  %v31 = vld [vmem:[%s0 + $0x4] sm:$0xf]
  %v32 = vld [vmem:[%s1] sm:$0xf]
  %v33 = vld [vmem:[%s1 + $0x4] sm:$0xf]
  %v34 = vld [vmem:[%s1 + $0x8] sm:$0xf]
  %v35 = vld [vmem:[%s1 + $0xc] sm:$0xf]
  %v36 = vld [vmem:[%s1 + $0x10] sm:$0xf]
  %v37 = vld [vmem:[%s1 + $0x14] sm:$0xf]
  %v38 = vld [vmem:[%s2] sm:$0xf]
  %v39 = vld [vmem:[%s2 + $0x4] sm:$0xf]
  %v40 = vld [vmem:[%s2 + $0x8] sm:$0xf]
  %v41 = vld [vmem:[%s2 + $0xc] sm:$0xf]
  %v44 = vunpack.c.l.b16 %v30
  %v45 = vunpack.c.l.b16 %v31
  %v46 = vpack.c.b16 %v45, %v44
  %v51 = vunpack.c.l.b16 %v38
  %v52 = vunpack.c.l.b16 %v39
  %v53 = vunpack.c.l.b16 %v40
  %v54 = vunpack.c.l.b16 %v41
  %v55 = vpack.c.b16 %v52, %v51
  %v56 = vpack.c.b16 %v54, %v53
  %vm59 = vcmask 261120
  %v61 = vsel %vm59, %v46, 0
  %63 = vmatprep.subr.bf16.mxu0 0
  %64 = vmatpush1.bf16.msra.mxu0 %v55
  %65 = vmatprep.subr.bf16.mxu0 0
  %66 = vmatpush1.bf16.msra.mxu0 %v56
  %67 = vmatprep.subr.bf16.mxu0 0
  %68 = vmatpush1.bf16.msra.mxu0 0
  %69 = vmatprep.subr.bf16.mxu0 0
  %70 = vmatpush1.bf16.msra.mxu0 0
  %71 = vmatprep.subr.bf16.mxu0 0
  %72 = vmatpush1.bf16.msra.mxu0 0
  %73 = vmatprep.subr.bf16.mxu0 0
  %74 = vmatpush1.bf16.msra.mxu0 0
  %75 = vmatprep.subr.bf16.mxu0 0
  %76 = vmatpush1.bf16.msra.mxu0 0
  %77 = vmatprep.subr.bf16.mxu0 0
  %78 = vmatpush1.bf16.msra.mxu0 0
  %79 = vmatprep.subr.bf16.mxu0 0
  %80 = vmatpush1.bf16.msra.mxu0 0
  %81 = vmatprep.subr.bf16.mxu0 0
  %82 = vmatpush1.bf16.msra.mxu0 0
  %83 = vmatprep.subr.bf16.mxu0 0
  %84 = vmatpush1.bf16.msra.mxu0 0
  %85 = vmatprep.subr.bf16.mxu0 0
  %86 = vmatpush1.bf16.msra.mxu0 0
  %87 = vmatprep.subr.bf16.mxu0 0
  %88 = vmatpush1.bf16.msra.mxu0 0
  %89 = vmatprep.subr.bf16.mxu0 0
  %90 = vmatpush1.bf16.msra.mxu0 0
  %91 = vmatprep.subr.bf16.mxu0 0
  %92 = vmatpush1.bf16.msra.mxu0 0
  %93 = vmatprep.subr.bf16.mxu0 0
  %94 = vmatpush1.bf16.msra.mxu0 0
  %95 = vmatprep.mubr.bf16.mxu0 0
  %96 = vmatmul.mubr.bf16.gmra.mrb[0].mxu0 %v61
  %v97 = vpop.f32.mrb[0].mxu0
  %v98 = vadd.f32 0.0, %v97
  %v99 = vpop.f32.mrb[0].mxu0
  %v100 = vpop.f32.mrb[0].mxu0
  %v101 = vadd.f32 0.0, %v100
  %v102 = vpop.f32.mrb[0].mxu0
  %103 = vdwg.mxu0
  %106 = vrot.lane.b32.xlu0 %v98, 96
  %v107 = vpop.permute.xlu0 %106
  %108 = vrot.lane.b32.xlu0 %v101, 96
  %v109 = vpop.permute.xlu0 %108
  %112 = vrot.lane.b32.xlu0 %v98, 64
  %v113 = vpop.permute.xlu0 %112
  %114 = vrot.lane.b32.xlu0 %v101, 64
  %v115 = vpop.permute.xlu0 %114
  %v118 = vpack.c.bf16 %v101, %v98
  %v119 = vpack.c.bf16 %v109, %v107
  %v120 = vpack.c.bf16 %v115, %v113
  %v121 = vld [vmem:[%s3] sm:$0xff]
  %v122 = vld [vmem:[%s3 + $0x8] sm:$0xff]
  %v123 = vld [vmem:[%s3 + $0x10] sm:$0xff]
  %v124 = vld [vmem:[%s3 + $0x18] sm:$0xff]
  %v125 = vld [vmem:[%s3 + $0x20] sm:$0xff]
  %v126 = vld [vmem:[%s3 + $0x28] sm:$0xff]
  %v133 = vunpack.c.l.b16 %v32
  %v134 = vunpack.c.l.b16 %v33
  %v135 = vunpack.c.l.b16 %v34
  %v136 = vunpack.c.l.b16 %v35
  %v137 = vunpack.c.l.b16 %v36
  %v138 = vunpack.c.l.b16 %v37
  %v139 = vpack.c.b16 %v134, %v133
  %v140 = vpack.c.b16 %v136, %v135
  %v141 = vpack.c.b16 %v138, %v137
  %vm142 = vcmask 392192
  %v144 = vsel %vm142, %v139, 0
  %v147 = vsel %vm142, %v140, 0
  %v150 = vsel %vm142, %v141, 0
  %152 = vmatprep.subr.bf16.mxu0 0
  %153 = vmatpush1.bf16.msra.mxu0 %v118
  %154 = vmatprep.subr.bf16.mxu0 0
  %155 = vmatpush1.bf16.msra.mxu0 %v119
  %156 = vmatprep.subr.bf16.mxu0 0
  %157 = vmatpush1.bf16.msra.mxu0 %v120
  %158 = vmatprep.subr.bf16.mxu0 0
  %159 = vmatpush1.bf16.msra.mxu0 0
  %160 = vmatprep.subr.bf16.mxu0 0
  %161 = vmatpush1.bf16.msra.mxu0 0
  %162 = vmatprep.subr.bf16.mxu0 0
  %163 = vmatpush1.bf16.msra.mxu0 0
  %164 = vmatprep.subr.bf16.mxu0 0
  %165 = vmatpush1.bf16.msra.mxu0 0
  %166 = vmatprep.subr.bf16.mxu0 0
  %167 = vmatpush1.bf16.msra.mxu0 0
  %168 = vmatprep.subr.bf16.mxu0 0
  %169 = vmatpush1.bf16.msra.mxu0 0
  %170 = vmatprep.subr.bf16.mxu0 0
  %171 = vmatpush1.bf16.msra.mxu0 0
  %172 = vmatprep.subr.bf16.mxu0 0
  %173 = vmatpush1.bf16.msra.mxu0 0
  %174 = vmatprep.subr.bf16.mxu0 0
  %175 = vmatpush1.bf16.msra.mxu0 0
  %176 = vmatprep.subr.bf16.mxu0 0
  %177 = vmatpush1.bf16.msra.mxu0 0
  %178 = vmatprep.subr.bf16.mxu0 0
  %179 = vmatpush1.bf16.msra.mxu0 0
  %180 = vmatprep.subr.bf16.mxu0 0
  %181 = vmatpush1.bf16.msra.mxu0 0
  %182 = vmatprep.subr.bf16.mxu0 0
  %183 = vmatpush1.bf16.msra.mxu0 0
  %184 = vmatprep.mubr.bf16.mxu0 0
  %185 = vmatmul.mubr.bf16.gmra.mrb[0].mxu0 %v144
  %v186 = vpop.f32.mrb[0].mxu0
  %v187 = vadd.f32 %v121, %v186
  %v188 = vpop.f32.mrb[0].mxu0
  %v189 = vpop.f32.mrb[0].mxu0
  %v190 = vadd.f32 %v122, %v189
  %v191 = vpop.f32.mrb[0].mxu0
  %192 = vmatprep.mubr.bf16.mxu0 0
  %193 = vmatmul.mubr.bf16.gmra.mrb[0].mxu0 %v147
  %v194 = vpop.f32.mrb[0].mxu0
  %v195 = vadd.f32 %v123, %v194
  %v196 = vpop.f32.mrb[0].mxu0
  %v197 = vpop.f32.mrb[0].mxu0
  %v198 = vadd.f32 %v124, %v197
  %v199 = vpop.f32.mrb[0].mxu0
  %200 = vmatprep.mubr.bf16.mxu0 0
  %201 = vmatmul.mubr.bf16.gmra.mrb[0].mxu0 %v150
  %v202 = vpop.f32.mrb[0].mxu0
  %v203 = vadd.f32 %v125, %v202
  %v204 = vpop.f32.mrb[0].mxu0
  %v205 = vpop.f32.mrb[0].mxu0
  %v206 = vadd.f32 %v126, %v205
  %v207 = vpop.f32.mrb[0].mxu0
  %208 = vdwg.mxu0
  %v209 = vmax.f32 %v187, 0.0
  %v210 = vmax.f32 %v190, 0.0
  %v211 = vmax.f32 %v195, 0.0
  %v212 = vmax.f32 %v198, 0.0
  %v213 = vmax.f32 %v203, 0.0
  %v214 = vmax.f32 %v206, 0.0
  %v215 = vpack.c.bf16 %v210, %v209
  %v216 = vpack.c.bf16 %v212, %v211
  %v217 = vpack.c.bf16 %v214, %v213
  %s218 = scalar_lea.vmem %s2, 16
  %v219 = vld [vmem:[%s218] sm:$0xf]
  %v220 = vld [vmem:[%s218 + $0x4] sm:$0xf]
  %v221 = vld [vmem:[%s218 + $0x8] sm:$0xf]
  %v222 = vld [vmem:[%s218 + $0xc] sm:$0xf]
  %v227 = vunpack.c.l.b16 %v219
  %v228 = vunpack.c.l.b16 %v220
  %v229 = vunpack.c.l.b16 %v221
  %v230 = vunpack.c.l.b16 %v222
  %v231 = vpack.c.b16 %v228, %v227
  %v232 = vpack.c.b16 %v230, %v229
  %v236 = vsel %vm59, %v215, 0
  %v239 = vsel %vm59, %v216, 0
  %v242 = vsel %vm59, %v217, 0
  %244 = vmatprep.subr.bf16.mxu0 0
  %245 = vmatpush1.bf16.msra.mxu0 %v231
  %246 = vmatprep.subr.bf16.mxu0 0
  %247 = vmatpush1.bf16.msra.mxu0 %v232
  %248 = vmatprep.subr.bf16.mxu0 0
  %249 = vmatpush1.bf16.msra.mxu0 0
  %250 = vmatprep.subr.bf16.mxu0 0
  %251 = vmatpush1.bf16.msra.mxu0 0
  %252 = vmatprep.subr.bf16.mxu0 0
  %253 = vmatpush1.bf16.msra.mxu0 0
  %254 = vmatprep.subr.bf16.mxu0 0
  %255 = vmatpush1.bf16.msra.mxu0 0
  %256 = vmatprep.subr.bf16.mxu0 0
  %257 = vmatpush1.bf16.msra.mxu0 0
  %258 = vmatprep.subr.bf16.mxu0 0
  %259 = vmatpush1.bf16.msra.mxu0 0
  %260 = vmatprep.subr.bf16.mxu0 0
  %261 = vmatpush1.bf16.msra.mxu0 0
  %262 = vmatprep.subr.bf16.mxu0 0
  %263 = vmatpush1.bf16.msra.mxu0 0
  %264 = vmatprep.subr.bf16.mxu0 0
  %265 = vmatpush1.bf16.msra.mxu0 0
  %266 = vmatprep.subr.bf16.mxu0 0
  %267 = vmatpush1.bf16.msra.mxu0 0
  %268 = vmatprep.subr.bf16.mxu0 0
  %269 = vmatpush1.bf16.msra.mxu0 0
  %270 = vmatprep.subr.bf16.mxu0 0
  %271 = vmatpush1.bf16.msra.mxu0 0
  %272 = vmatprep.subr.bf16.mxu0 0
  %273 = vmatpush1.bf16.msra.mxu0 0
  %274 = vmatprep.subr.bf16.mxu0 0
  %275 = vmatpush1.bf16.msra.mxu0 0
  %276 = vmatprep.mubr.bf16.mxu0 0
  %277 = vmatmul.mubr.bf16.gmra.mrb[0].mxu0 %v236
  %v278 = vpop.f32.mrb[0].mxu0
  %v279 = vadd.f32 0.0, %v278
  %v280 = vpop.f32.mrb[0].mxu0
  %v281 = vpop.f32.mrb[0].mxu0
  %v282 = vadd.f32 0.0, %v281
  %v283 = vpop.f32.mrb[0].mxu0
  %284 = vmatprep.mubr.bf16.mxu0 0
  %285 = vmatmul.mubr.bf16.gmra.mrb[0].mxu0 %v239
  %v286 = vpop.f32.mrb[0].mxu0
  %v287 = vadd.f32 0.0, %v286
  %v288 = vpop.f32.mrb[0].mxu0
  %v289 = vpop.f32.mrb[0].mxu0
  %v290 = vadd.f32 0.0, %v289
  %v291 = vpop.f32.mrb[0].mxu0
  %292 = vmatprep.mubr.bf16.mxu0 0
  %293 = vmatmul.mubr.bf16.gmra.mrb[0].mxu0 %v242
  %v294 = vpop.f32.mrb[0].mxu0
  %v295 = vadd.f32 0.0, %v294
  %v296 = vpop.f32.mrb[0].mxu0
  %v297 = vpop.f32.mrb[0].mxu0
  %v298 = vadd.f32 0.0, %v297
  %v299 = vpop.f32.mrb[0].mxu0
  %300 = vdwg.mxu0
  %303 = vrot.lane.b32.xlu0 %v287, 96
  %v304 = vpop.permute.xlu0 %303
  %305 = vrot.lane.b32.xlu0 %v290, 96
  %v306 = vpop.permute.xlu0 %305
  %311 = vrot.lane.b32.xlu0 %v295, 64
  %v312 = vpop.permute.xlu0 %311
  %313 = vrot.lane.b32.xlu0 %v298, 64
  %v314 = vpop.permute.xlu0 %313
  %v317 = vpack.c.bf16 %v282, %v279
  %v318 = vpack.c.bf16 %v306, %v304
  %v319 = vpack.c.bf16 %v314, %v312
  %s320 = scalar_lea.vmem %s3, 48
  %v321 = vld [vmem:[%s320] sm:$0xff]
  %v322 = vld [vmem:[%s320 + $0x8] sm:$0xff]
  %v323 = vld [vmem:[%s320 + $0x10] sm:$0xff]
  %v324 = vld [vmem:[%s320 + $0x18] sm:$0xff]
  %v325 = vld [vmem:[%s320 + $0x20] sm:$0xff]
  %v326 = vld [vmem:[%s320 + $0x28] sm:$0xff]
  %327 = vmatprep.subr.bf16.mxu0 0
  %328 = vmatpush1.bf16.msra.mxu0 %v317
  %329 = vmatprep.subr.bf16.mxu0 0
  %330 = vmatpush1.bf16.msra.mxu0 %v318
  %331 = vmatprep.subr.bf16.mxu0 0
  %332 = vmatpush1.bf16.msra.mxu0 %v319
  %333 = vmatprep.subr.bf16.mxu0 0
  %334 = vmatpush1.bf16.msra.mxu0 0
  %335 = vmatprep.subr.bf16.mxu0 0
  %336 = vmatpush1.bf16.msra.mxu0 0
  %337 = vmatprep.subr.bf16.mxu0 0
  %338 = vmatpush1.bf16.msra.mxu0 0
  %339 = vmatprep.subr.bf16.mxu0 0
  %340 = vmatpush1.bf16.msra.mxu0 0
  %341 = vmatprep.subr.bf16.mxu0 0
  %342 = vmatpush1.bf16.msra.mxu0 0
  %343 = vmatprep.subr.bf16.mxu0 0
  %344 = vmatpush1.bf16.msra.mxu0 0
  %345 = vmatprep.subr.bf16.mxu0 0
  %346 = vmatpush1.bf16.msra.mxu0 0
  %347 = vmatprep.subr.bf16.mxu0 0
  %348 = vmatpush1.bf16.msra.mxu0 0
  %349 = vmatprep.subr.bf16.mxu0 0
  %350 = vmatpush1.bf16.msra.mxu0 0
  %351 = vmatprep.subr.bf16.mxu0 0
  %352 = vmatpush1.bf16.msra.mxu0 0
  %353 = vmatprep.subr.bf16.mxu0 0
  %354 = vmatpush1.bf16.msra.mxu0 0
  %355 = vmatprep.subr.bf16.mxu0 0
  %356 = vmatpush1.bf16.msra.mxu0 0
  %357 = vmatprep.subr.bf16.mxu0 0
  %358 = vmatpush1.bf16.msra.mxu0 0
  %359 = vmatprep.mubr.bf16.mxu0 0
  %360 = vmatmul.mubr.bf16.gmra.mrb[0].mxu0 %v144
  %v361 = vpop.f32.mrb[0].mxu0
  %v362 = vadd.f32 %v321, %v361
  %v363 = vpop.f32.mrb[0].mxu0
  %v364 = vpop.f32.mrb[0].mxu0
  %v365 = vadd.f32 %v322, %v364
  %v366 = vpop.f32.mrb[0].mxu0
  %367 = vmatprep.mubr.bf16.mxu0 0
  %368 = vmatmul.mubr.bf16.gmra.mrb[0].mxu0 %v147
  %v369 = vpop.f32.mrb[0].mxu0
  %v370 = vadd.f32 %v323, %v369
  %v371 = vpop.f32.mrb[0].mxu0
  %v372 = vpop.f32.mrb[0].mxu0
  %v373 = vadd.f32 %v324, %v372
  %v374 = vpop.f32.mrb[0].mxu0
  %375 = vmatprep.mubr.bf16.mxu0 0
  %376 = vmatmul.mubr.bf16.gmra.mrb[0].mxu0 %v150
  %v377 = vpop.f32.mrb[0].mxu0
  %v378 = vadd.f32 %v325, %v377
  %v379 = vpop.f32.mrb[0].mxu0
  %v380 = vpop.f32.mrb[0].mxu0
  %v381 = vadd.f32 %v326, %v380
  %v382 = vpop.f32.mrb[0].mxu0
  %383 = vdwg.mxu0
  %v384 = vmax.f32 %v362, 0.0
  %v385 = vmax.f32 %v365, 0.0
  %v386 = vmax.f32 %v370, 0.0
  %v387 = vmax.f32 %v373, 0.0
  %v388 = vmax.f32 %v378, 0.0
  %v389 = vmax.f32 %v381, 0.0
  %s390 = scalar_lea.vmem %s7, 8
  %v391 = vld [vmem:[%s390] sm:$0x77]
  %v392 = vpack.c.bf16 %v385, %v384
  %v393 = vpack.c.bf16 %v387, %v386
  %v394 = vpack.c.bf16 %v389, %v388
  %s395 = scalar_lea.vmem %s4, 32
  %v396 = vld [vmem:[%s395] sm:$0xff]
  %v397 = vld [vmem:[%s395 + $0x8] sm:$0xff]
  %v398 = vld [vmem:[%s395 + $0x10] sm:$0xff]
  %v399 = vld [vmem:[%s395 + $0x18] sm:$0xff]
  %v401 = vlaneseq
  %v402 = vshrl.u32 %v401, 7
  %v403 = vsub.s32 0, %v402
  %v404 = vrot.slane %v391, %v403
  %v405 = vlaneseq
  %v406 = vshrl.u32 %v405, 7
  %v407 = vsub.s32 4, %v406
  %v408 = vrot.slane %v391, %v407
  %v411 = vlaneseq
  %v412 = vshrl.u32 %v411, 7
  %v413 = vsub.s32 0, %v412
  %v414 = vrot.slane %v404, %v413
  %v415 = vlaneseq
  %v416 = vshrl.u32 %v415, 7
  %v417 = vsub.s32 0, %v416
  %v418 = vrot.slane %v408, %v417
  %v423 = vunpack.c.l.b16 %v396
  %v424 = vunpack.c.h.b16 %v396
  %v425 = vunpack.c.l.b16 %v397
  %v426 = vunpack.c.h.b16 %v397
  %v427 = vunpack.c.l.b16 %v398
  %v428 = vunpack.c.h.b16 %v398
  %v429 = vunpack.c.l.b16 %v399
  %v430 = vunpack.c.h.b16 %v399
  %v431 = vpack.c.b16 %v425, %v423
  %v432 = vpack.c.b16 %v426, %v424
  %v433 = vpack.c.b16 %v429, %v427
  %v434 = vpack.c.b16 %v430, %v428
  %v440 = vsel %vm59, %v392, 0
  %v443 = vsel %vm59, %v393, 0
  %v446 = vsel %vm59, %v394, 0
  %448 = vmatprep.subr.bf16.mxu0 %v432
  %449 = vmatpush1.bf16.msra.mxu0 %v431
  %450 = vmatprep.subr.bf16.mxu0 %v434
  %451 = vmatpush1.bf16.msra.mxu0 %v433
  %452 = vmatprep.subr.bf16.mxu0 0
  %453 = vmatpush1.bf16.msra.mxu0 0
  %454 = vmatprep.subr.bf16.mxu0 0
  %455 = vmatpush1.bf16.msra.mxu0 0
  %456 = vmatprep.subr.bf16.mxu0 0
  %457 = vmatpush1.bf16.msra.mxu0 0
  %458 = vmatprep.subr.bf16.mxu0 0
  %459 = vmatpush1.bf16.msra.mxu0 0
  %460 = vmatprep.subr.bf16.mxu0 0
  %461 = vmatpush1.bf16.msra.mxu0 0
  %462 = vmatprep.subr.bf16.mxu0 0
  %463 = vmatpush1.bf16.msra.mxu0 0
  %464 = vmatprep.subr.bf16.mxu0 0
  %465 = vmatpush1.bf16.msra.mxu0 0
  %466 = vmatprep.subr.bf16.mxu0 0
  %467 = vmatpush1.bf16.msra.mxu0 0
  %468 = vmatprep.subr.bf16.mxu0 0
  %469 = vmatpush1.bf16.msra.mxu0 0
  %470 = vmatprep.subr.bf16.mxu0 0
  %471 = vmatpush1.bf16.msra.mxu0 0
  %472 = vmatprep.subr.bf16.mxu0 0
  %473 = vmatpush1.bf16.msra.mxu0 0
  %474 = vmatprep.subr.bf16.mxu0 0
  %475 = vmatpush1.bf16.msra.mxu0 0
  %476 = vmatprep.subr.bf16.mxu0 0
  %477 = vmatpush1.bf16.msra.mxu0 0
  %478 = vmatprep.subr.bf16.mxu0 0
  %479 = vmatpush1.bf16.msra.mxu0 0
  %480 = vmatprep.mubr.bf16.mxu0 0
  %481 = vmatmul.mubr.bf16.gmra.mrb[0].mxu0 %v440
  %v482 = vpop.f32.mrb[0].mxu0
  %v483 = vadd.f32 %v414, %v482
  %v484 = vpop.f32.mrb[0].mxu0
  %v485 = vadd.f32 %v418, %v484
  %v486 = vpop.f32.mrb[0].mxu0
  %v487 = vadd.f32 %v414, %v486
  %v488 = vpop.f32.mrb[0].mxu0
  %v489 = vadd.f32 %v418, %v488
  %490 = vmatprep.mubr.bf16.mxu0 0
  %491 = vmatmul.mubr.bf16.gmra.mrb[0].mxu0 %v443
  %v492 = vpop.f32.mrb[0].mxu0
  %v493 = vadd.f32 %v414, %v492
  %v494 = vpop.f32.mrb[0].mxu0
  %v495 = vadd.f32 %v418, %v494
  %v496 = vpop.f32.mrb[0].mxu0
  %v497 = vadd.f32 %v414, %v496
  %v498 = vpop.f32.mrb[0].mxu0
  %v499 = vadd.f32 %v418, %v498
  %500 = vmatprep.mubr.bf16.mxu0 0
  %501 = vmatmul.mubr.bf16.gmra.mrb[0].mxu0 %v446
  %v502 = vpop.f32.mrb[0].mxu0
  %v503 = vadd.f32 %v414, %v502
  %v504 = vpop.f32.mrb[0].mxu0
  %v505 = vadd.f32 %v418, %v504
  %v506 = vpop.f32.mrb[0].mxu0
  %v507 = vadd.f32 %v414, %v506
  %v508 = vpop.f32.mrb[0].mxu0
  %v509 = vadd.f32 %v418, %v508
  %510 = vdwg.mxu0
  %v511 = vmax.f32 %v483, 0.0
  %v512 = vmax.f32 %v485, 0.0
  %v513 = vmax.f32 %v487, 0.0
  %v514 = vmax.f32 %v489, 0.0
  %v515 = vmax.f32 %v493, 0.0
  %v516 = vmax.f32 %v495, 0.0
  %v517 = vmax.f32 %v497, 0.0
  %v518 = vmax.f32 %v499, 0.0
  %v519 = vmax.f32 %v503, 0.0
  %v520 = vmax.f32 %v505, 0.0
  %v521 = vmax.f32 %v507, 0.0
  %v522 = vmax.f32 %v509, 0.0
  %v523 = vpack.c.bf16 %v513, %v511
  %v524 = vpack.c.bf16 %v514, %v512
  %v525 = vpack.c.bf16 %v517, %v515
  %v526 = vpack.c.bf16 %v518, %v516
  %v527 = vpack.c.bf16 %v521, %v519
  %v528 = vpack.c.bf16 %v522, %v520
  %s529 = scalar_lea.vmem %s5, 128
  %v530 = vld [vmem:[%s529] sm:$0xf]
  %v531 = vld [vmem:[%s529 + $0x4] sm:$0xf]
  %v532 = vld [vmem:[%s529 + $0x8] sm:$0xf]
  %v533 = vld [vmem:[%s529 + $0xc] sm:$0xf]
  %v534 = vld [vmem:[%s529 + $0x10] sm:$0xf]
  %v535 = vld [vmem:[%s529 + $0x14] sm:$0xf]
  %v536 = vld [vmem:[%s529 + $0x18] sm:$0xf]
  %v537 = vld [vmem:[%s529 + $0x1c] sm:$0xf]
  %v538 = vld [vmem:[%s529 + $0x20] sm:$0xf]
  %v539 = vld [vmem:[%s529 + $0x24] sm:$0xf]
  %v540 = vld [vmem:[%s529 + $0x28] sm:$0xf]
  %v541 = vld [vmem:[%s529 + $0x2c] sm:$0xf]
  %v542 = vld [vmem:[%s529 + $0x30] sm:$0xf]
  %v543 = vld [vmem:[%s529 + $0x34] sm:$0xf]
  %v544 = vld [vmem:[%s529 + $0x38] sm:$0xf]
  %v545 = vld [vmem:[%s529 + $0x3c] sm:$0xf]
  %v546 = vld [vmem:[%s529 + $0x40] sm:$0xf]
  %v547 = vld [vmem:[%s529 + $0x44] sm:$0xf]
  %v548 = vld [vmem:[%s529 + $0x48] sm:$0xf]
  %v549 = vld [vmem:[%s529 + $0x4c] sm:$0xf]
  %v550 = vld [vmem:[%s529 + $0x50] sm:$0xf]
  %v551 = vld [vmem:[%s529 + $0x54] sm:$0xf]
  %v552 = vld [vmem:[%s529 + $0x58] sm:$0xf]
  %v553 = vld [vmem:[%s529 + $0x5c] sm:$0xf]
  %v554 = vld [vmem:[%s529 + $0x60] sm:$0xf]
  %v555 = vld [vmem:[%s529 + $0x64] sm:$0xf]
  %v556 = vld [vmem:[%s529 + $0x68] sm:$0xf]
  %v557 = vld [vmem:[%s529 + $0x6c] sm:$0xf]
  %v558 = vld [vmem:[%s529 + $0x70] sm:$0xf]
  %v559 = vld [vmem:[%s529 + $0x74] sm:$0xf]
  %v560 = vld [vmem:[%s529 + $0x78] sm:$0xf]
  %v561 = vld [vmem:[%s529 + $0x7c] sm:$0xf]
  %v562 = vlaneseq
  %v563 = vshrl.u32 %v562, 7
  %v564 = vsub.s32 1, %v563
  %v565 = vrot.slane %v391, %v564
  %v598 = vunpack.c.l.b16 %v530
  %v599 = vunpack.c.l.b16 %v531
  %v600 = vunpack.c.l.b16 %v532
  %v601 = vunpack.c.l.b16 %v533
  %v602 = vunpack.c.l.b16 %v534
  %v603 = vunpack.c.l.b16 %v535
  %v604 = vunpack.c.l.b16 %v536
  %v605 = vunpack.c.l.b16 %v537
  %v606 = vunpack.c.l.b16 %v538
  %v607 = vunpack.c.l.b16 %v539
  %v608 = vunpack.c.l.b16 %v540
  %v609 = vunpack.c.l.b16 %v541
  %v610 = vunpack.c.l.b16 %v542
  %v611 = vunpack.c.l.b16 %v543
  %v612 = vunpack.c.l.b16 %v544
  %v613 = vunpack.c.l.b16 %v545
  %v614 = vunpack.c.l.b16 %v546
  %v615 = vunpack.c.l.b16 %v547
  %v616 = vunpack.c.l.b16 %v548
  %v617 = vunpack.c.l.b16 %v549
  %v618 = vunpack.c.l.b16 %v550
  %v619 = vunpack.c.l.b16 %v551
  %v620 = vunpack.c.l.b16 %v552
  %v621 = vunpack.c.l.b16 %v553
  %v622 = vunpack.c.l.b16 %v554
  %v623 = vunpack.c.l.b16 %v555
  %v624 = vunpack.c.l.b16 %v556
  %v625 = vunpack.c.l.b16 %v557
  %v626 = vunpack.c.l.b16 %v558
  %v627 = vunpack.c.l.b16 %v559
  %v628 = vunpack.c.l.b16 %v560
  %v629 = vunpack.c.l.b16 %v561
  %v630 = vpack.c.b16 %v599, %v598
  %v631 = vpack.c.b16 %v601, %v600
  %v632 = vpack.c.b16 %v603, %v602
  %v633 = vpack.c.b16 %v605, %v604
  %v634 = vpack.c.b16 %v607, %v606
  %v635 = vpack.c.b16 %v609, %v608
  %v636 = vpack.c.b16 %v611, %v610
  %v637 = vpack.c.b16 %v613, %v612
  %v638 = vpack.c.b16 %v615, %v614
  %v639 = vpack.c.b16 %v617, %v616
  %v640 = vpack.c.b16 %v619, %v618
  %v641 = vpack.c.b16 %v621, %v620
  %v642 = vpack.c.b16 %v623, %v622
  %v643 = vpack.c.b16 %v625, %v624
  %v644 = vpack.c.b16 %v627, %v626
  %v645 = vpack.c.b16 %v629, %v628
  %662 = vmatprep.subr.bf16.mxu0 0
  %663 = vmatpush1.bf16.msra.mxu0 %v630
  %664 = vmatprep.subr.bf16.mxu0 0
  %665 = vmatpush1.bf16.msra.mxu0 %v631
  %666 = vmatprep.subr.bf16.mxu0 0
  %667 = vmatpush1.bf16.msra.mxu0 %v632
  %668 = vmatprep.subr.bf16.mxu0 0
  %669 = vmatpush1.bf16.msra.mxu0 %v633
  %670 = vmatprep.subr.bf16.mxu0 0
  %671 = vmatpush1.bf16.msra.mxu0 %v634
  %672 = vmatprep.subr.bf16.mxu0 0
  %673 = vmatpush1.bf16.msra.mxu0 %v635
  %674 = vmatprep.subr.bf16.mxu0 0
  %675 = vmatpush1.bf16.msra.mxu0 %v636
  %676 = vmatprep.subr.bf16.mxu0 0
  %677 = vmatpush1.bf16.msra.mxu0 %v637
  %678 = vmatprep.subr.bf16.mxu0 0
  %679 = vmatpush1.bf16.msra.mxu0 %v638
  %680 = vmatprep.subr.bf16.mxu0 0
  %681 = vmatpush1.bf16.msra.mxu0 %v639
  %682 = vmatprep.subr.bf16.mxu0 0
  %683 = vmatpush1.bf16.msra.mxu0 %v640
  %684 = vmatprep.subr.bf16.mxu0 0
  %685 = vmatpush1.bf16.msra.mxu0 %v641
  %686 = vmatprep.subr.bf16.mxu0 0
  %687 = vmatpush1.bf16.msra.mxu0 %v642
  %688 = vmatprep.subr.bf16.mxu0 0
  %689 = vmatpush1.bf16.msra.mxu0 %v643
  %690 = vmatprep.subr.bf16.mxu0 0
  %691 = vmatpush1.bf16.msra.mxu0 %v644
  %692 = vmatprep.subr.bf16.mxu0 0
  %693 = vmatpush1.bf16.msra.mxu0 %v645
  %694 = vmatprep.mubr.bf16.mxu0 %v524
  %695 = vmatmul.mubr.bf16.gmra.mrb[0].mxu0 %v523
  %v696 = vpop.f32.mrb[0].mxu0
  %v697 = vadd.f32 %v565, %v696
  %v698 = vpop.f32.mrb[0].mxu0
  %v699 = vpop.f32.mrb[0].mxu0
  %v700 = vadd.f32 %v565, %v699
  %v701 = vpop.f32.mrb[0].mxu0
  %702 = vmatprep.mubr.bf16.mxu0 %v526
  %703 = vmatmul.mubr.bf16.gmra.mrb[0].mxu0 %v525
  %v704 = vpop.f32.mrb[0].mxu0
  %v705 = vadd.f32 %v565, %v704
  %v706 = vpop.f32.mrb[0].mxu0
  %v707 = vpop.f32.mrb[0].mxu0
  %v708 = vadd.f32 %v565, %v707
  %v709 = vpop.f32.mrb[0].mxu0
  %710 = vmatprep.mubr.bf16.mxu0 %v528
  %711 = vmatmul.mubr.bf16.gmra.mrb[0].mxu0 %v527
  %v712 = vpop.f32.mrb[0].mxu0
  %v713 = vadd.f32 %v565, %v712
  %v714 = vpop.f32.mrb[0].mxu0
  %v715 = vpop.f32.mrb[0].mxu0
  %v716 = vadd.f32 %v565, %v715
  %v717 = vpop.f32.mrb[0].mxu0
  %718 = vdwg.mxu0
  %v719 = vmax.f32 %v697, 0.0
  %v720 = vmax.f32 %v700, 0.0
  %v721 = vmax.f32 %v705, 0.0
  %v722 = vmax.f32 %v708, 0.0
  %v723 = vmax.f32 %v713, 0.0
  %v724 = vmax.f32 %v716, 0.0
  %v725 = vpack.c.bf16 %v720, %v719
  %v726 = vpack.c.bf16 %v722, %v721
  %v727 = vpack.c.bf16 %v724, %v723
  %s728 = scalar_lea.vmem %s6, 64
  %v729 = vld [vmem:[%s728] sm:$0xf]
  %v730 = vld [vmem:[%s728 + $0x4] sm:$0xf]
  %v731 = vld [vmem:[%s728 + $0x8] sm:$0xf]
  %v732 = vld [vmem:[%s728 + $0xc] sm:$0xf]
  %v733 = vld [vmem:[%s728 + $0x10] sm:$0xf]
  %v734 = vld [vmem:[%s728 + $0x14] sm:$0xf]
  %v735 = vld [vmem:[%s728 + $0x18] sm:$0xf]
  %v736 = vld [vmem:[%s728 + $0x1c] sm:$0xf]
  %v737 = vld [vmem:[%s728 + $0x20] sm:$0xf]
  %v738 = vld [vmem:[%s728 + $0x24] sm:$0xf]
  %v739 = vld [vmem:[%s728 + $0x28] sm:$0xf]
  %v740 = vld [vmem:[%s728 + $0x2c] sm:$0xf]
  %v741 = vld [vmem:[%s728 + $0x30] sm:$0xf]
  %v742 = vld [vmem:[%s728 + $0x34] sm:$0xf]
  %v743 = vld [vmem:[%s728 + $0x38] sm:$0xf]
  %v744 = vld [vmem:[%s728 + $0x3c] sm:$0xf]
  %v745 = vlaneseq
  %v746 = vshrl.u32 %v745, 7
  %v747 = vsub.s32 2, %v746
  %v748 = vrot.slane %v391, %v747
  %v765 = vunpack.c.l.b16 %v729
  %v766 = vunpack.c.l.b16 %v730
  %v767 = vunpack.c.l.b16 %v731
  %v768 = vunpack.c.l.b16 %v732
  %v769 = vunpack.c.l.b16 %v733
  %v770 = vunpack.c.l.b16 %v734
  %v771 = vunpack.c.l.b16 %v735
  %v772 = vunpack.c.l.b16 %v736
  %v773 = vunpack.c.l.b16 %v737
  %v774 = vunpack.c.l.b16 %v738
  %v775 = vunpack.c.l.b16 %v739
  %v776 = vunpack.c.l.b16 %v740
  %v777 = vunpack.c.l.b16 %v741
  %v778 = vunpack.c.l.b16 %v742
  %v779 = vunpack.c.l.b16 %v743
  %v780 = vunpack.c.l.b16 %v744
  %v781 = vpack.c.b16 %v766, %v765
  %v782 = vpack.c.b16 %v768, %v767
  %v783 = vpack.c.b16 %v770, %v769
  %v784 = vpack.c.b16 %v772, %v771
  %v785 = vpack.c.b16 %v774, %v773
  %v786 = vpack.c.b16 %v776, %v775
  %v787 = vpack.c.b16 %v778, %v777
  %v788 = vpack.c.b16 %v780, %v779
  %797 = vmatprep.subr.bf16.mxu0 0
  %798 = vmatpush1.bf16.msra.mxu0 %v781
  %799 = vmatprep.subr.bf16.mxu0 0
  %800 = vmatpush1.bf16.msra.mxu0 %v782
  %801 = vmatprep.subr.bf16.mxu0 0
  %802 = vmatpush1.bf16.msra.mxu0 %v783
  %803 = vmatprep.subr.bf16.mxu0 0
  %804 = vmatpush1.bf16.msra.mxu0 %v784
  %805 = vmatprep.subr.bf16.mxu0 0
  %806 = vmatpush1.bf16.msra.mxu0 %v785
  %807 = vmatprep.subr.bf16.mxu0 0
  %808 = vmatpush1.bf16.msra.mxu0 %v786
  %809 = vmatprep.subr.bf16.mxu0 0
  %810 = vmatpush1.bf16.msra.mxu0 %v787
  %811 = vmatprep.subr.bf16.mxu0 0
  %812 = vmatpush1.bf16.msra.mxu0 %v788
  %813 = vmatprep.subr.bf16.mxu0 0
  %814 = vmatpush1.bf16.msra.mxu0 0
  %815 = vmatprep.subr.bf16.mxu0 0
  %816 = vmatpush1.bf16.msra.mxu0 0
  %817 = vmatprep.subr.bf16.mxu0 0
  %818 = vmatpush1.bf16.msra.mxu0 0
  %819 = vmatprep.subr.bf16.mxu0 0
  %820 = vmatpush1.bf16.msra.mxu0 0
  %821 = vmatprep.subr.bf16.mxu0 0
  %822 = vmatpush1.bf16.msra.mxu0 0
  %823 = vmatprep.subr.bf16.mxu0 0
  %824 = vmatpush1.bf16.msra.mxu0 0
  %825 = vmatprep.subr.bf16.mxu0 0
  %826 = vmatpush1.bf16.msra.mxu0 0
  %827 = vmatprep.subr.bf16.mxu0 0
  %828 = vmatpush1.bf16.msra.mxu0 0
  %829 = vmatprep.mubr.bf16.mxu0 0
  %830 = vmatmul.mubr.bf16.gmra.mrb[0].mxu0 %v725
  %v831 = vpop.f32.mrb[0].mxu0
  %v832 = vadd.f32 %v748, %v831
  %v833 = vpop.f32.mrb[0].mxu0
  %v834 = vpop.f32.mrb[0].mxu0
  %v835 = vadd.f32 %v748, %v834
  %v836 = vpop.f32.mrb[0].mxu0
  %837 = vmatprep.mubr.bf16.mxu0 0
  %838 = vmatmul.mubr.bf16.gmra.mrb[0].mxu0 %v726
  %v839 = vpop.f32.mrb[0].mxu0
  %v840 = vadd.f32 %v748, %v839
  %v841 = vpop.f32.mrb[0].mxu0
  %v842 = vpop.f32.mrb[0].mxu0
  %v843 = vadd.f32 %v748, %v842
  %v844 = vpop.f32.mrb[0].mxu0
  %845 = vmatprep.mubr.bf16.mxu0 0
  %846 = vmatmul.mubr.bf16.gmra.mrb[0].mxu0 %v727
  %v847 = vpop.f32.mrb[0].mxu0
  %v848 = vadd.f32 %v748, %v847
  %v849 = vpop.f32.mrb[0].mxu0
  %v850 = vpop.f32.mrb[0].mxu0
  %v851 = vadd.f32 %v748, %v850
  %v852 = vpop.f32.mrb[0].mxu0
  %853 = vdwg.mxu0
  %v854 = vmax.f32 %v832, 0.0
  %v855 = vmax.f32 %v835, 0.0
  %v856 = vmax.f32 %v840, 0.0
  %v857 = vmax.f32 %v843, 0.0
  %v858 = vmax.f32 %v848, 0.0
  %v859 = vmax.f32 %v851, 0.0
  %v860 = vld [vmem:[%s7] sm:$0x77]
  %v861 = vld [vmem:[%s4] sm:$0xff]
  %v862 = vld [vmem:[%s4 + $0x8] sm:$0xff]
  %v863 = vld [vmem:[%s4 + $0x10] sm:$0xff]
  %v864 = vld [vmem:[%s4 + $0x18] sm:$0xff]
  %v866 = vlaneseq
  %v867 = vshrl.u32 %v866, 7
  %v868 = vsub.s32 0, %v867
  %v869 = vrot.slane %v860, %v868
  %v870 = vlaneseq
  %v871 = vshrl.u32 %v870, 7
  %v872 = vsub.s32 4, %v871
  %v873 = vrot.slane %v860, %v872
  %v876 = vlaneseq
  %v877 = vshrl.u32 %v876, 7
  %v878 = vsub.s32 0, %v877
  %v879 = vrot.slane %v869, %v878
  %v880 = vlaneseq
  %v881 = vshrl.u32 %v880, 7
  %v882 = vsub.s32 0, %v881
  %v883 = vrot.slane %v873, %v882
  %v888 = vunpack.c.l.b16 %v861
  %v889 = vunpack.c.h.b16 %v861
  %v890 = vunpack.c.l.b16 %v862
  %v891 = vunpack.c.h.b16 %v862
  %v892 = vunpack.c.l.b16 %v863
  %v893 = vunpack.c.h.b16 %v863
  %v894 = vunpack.c.l.b16 %v864
  %v895 = vunpack.c.h.b16 %v864
  %v896 = vpack.c.b16 %v890, %v888
  %v897 = vpack.c.b16 %v891, %v889
  %v898 = vpack.c.b16 %v894, %v892
  %v899 = vpack.c.b16 %v895, %v893
  %904 = vmatprep.subr.bf16.mxu0 %v897
  %905 = vmatpush1.bf16.msra.mxu0 %v896
  %906 = vmatprep.subr.bf16.mxu0 %v899
  %907 = vmatpush1.bf16.msra.mxu0 %v898
  %908 = vmatprep.subr.bf16.mxu0 0
  %909 = vmatpush1.bf16.msra.mxu0 0
  %910 = vmatprep.subr.bf16.mxu0 0
  %911 = vmatpush1.bf16.msra.mxu0 0
  %912 = vmatprep.subr.bf16.mxu0 0
  %913 = vmatpush1.bf16.msra.mxu0 0
  %914 = vmatprep.subr.bf16.mxu0 0
  %915 = vmatpush1.bf16.msra.mxu0 0
  %916 = vmatprep.subr.bf16.mxu0 0
  %917 = vmatpush1.bf16.msra.mxu0 0
  %918 = vmatprep.subr.bf16.mxu0 0
  %919 = vmatpush1.bf16.msra.mxu0 0
  %920 = vmatprep.subr.bf16.mxu0 0
  %921 = vmatpush1.bf16.msra.mxu0 0
  %922 = vmatprep.subr.bf16.mxu0 0
  %923 = vmatpush1.bf16.msra.mxu0 0
  %924 = vmatprep.subr.bf16.mxu0 0
  %925 = vmatpush1.bf16.msra.mxu0 0
  %926 = vmatprep.subr.bf16.mxu0 0
  %927 = vmatpush1.bf16.msra.mxu0 0
  %928 = vmatprep.subr.bf16.mxu0 0
  %929 = vmatpush1.bf16.msra.mxu0 0
  %930 = vmatprep.subr.bf16.mxu0 0
  %931 = vmatpush1.bf16.msra.mxu0 0
  %932 = vmatprep.subr.bf16.mxu0 0
  %933 = vmatpush1.bf16.msra.mxu0 0
  %934 = vmatprep.subr.bf16.mxu0 0
  %935 = vmatpush1.bf16.msra.mxu0 0
  %936 = vmatprep.mubr.bf16.mxu0 0
  %937 = vmatmul.mubr.bf16.gmra.mrb[0].mxu0 %v61
  %v938 = vpop.f32.mrb[0].mxu0
  %v939 = vadd.f32 %v879, %v938
  %v940 = vpop.f32.mrb[0].mxu0
  %v941 = vadd.f32 %v883, %v940
  %v942 = vpop.f32.mrb[0].mxu0
  %v943 = vadd.f32 %v879, %v942
  %v944 = vpop.f32.mrb[0].mxu0
  %v945 = vadd.f32 %v883, %v944
  %946 = vdwg.mxu0
  %v947 = vmax.f32 %v939, 0.0
  %v948 = vmax.f32 %v941, 0.0
  %v949 = vmax.f32 %v943, 0.0
  %v950 = vmax.f32 %v945, 0.0
  %v951 = vpack.c.bf16 %v949, %v947
  %v952 = vpack.c.bf16 %v950, %v948
  %v953 = vld [vmem:[%s5] sm:$0xf]
  %v954 = vld [vmem:[%s5 + $0x4] sm:$0xf]
  %v955 = vld [vmem:[%s5 + $0x8] sm:$0xf]
  %v956 = vld [vmem:[%s5 + $0xc] sm:$0xf]
  %v957 = vld [vmem:[%s5 + $0x10] sm:$0xf]
  %v958 = vld [vmem:[%s5 + $0x14] sm:$0xf]
  %v959 = vld [vmem:[%s5 + $0x18] sm:$0xf]
  %v960 = vld [vmem:[%s5 + $0x1c] sm:$0xf]
  %v961 = vld [vmem:[%s5 + $0x20] sm:$0xf]
  %v962 = vld [vmem:[%s5 + $0x24] sm:$0xf]
  %v963 = vld [vmem:[%s5 + $0x28] sm:$0xf]
  %v964 = vld [vmem:[%s5 + $0x2c] sm:$0xf]
  %v965 = vld [vmem:[%s5 + $0x30] sm:$0xf]
  %v966 = vld [vmem:[%s5 + $0x34] sm:$0xf]
  %v967 = vld [vmem:[%s5 + $0x38] sm:$0xf]
  %v968 = vld [vmem:[%s5 + $0x3c] sm:$0xf]
  %v969 = vld [vmem:[%s5 + $0x40] sm:$0xf]
  %v970 = vld [vmem:[%s5 + $0x44] sm:$0xf]
  %v971 = vld [vmem:[%s5 + $0x48] sm:$0xf]
  %v972 = vld [vmem:[%s5 + $0x4c] sm:$0xf]
  %v973 = vld [vmem:[%s5 + $0x50] sm:$0xf]
  %v974 = vld [vmem:[%s5 + $0x54] sm:$0xf]
  %v975 = vld [vmem:[%s5 + $0x58] sm:$0xf]
  %v976 = vld [vmem:[%s5 + $0x5c] sm:$0xf]
  %v977 = vld [vmem:[%s5 + $0x60] sm:$0xf]
  %v978 = vld [vmem:[%s5 + $0x64] sm:$0xf]
  %v979 = vld [vmem:[%s5 + $0x68] sm:$0xf]
  %v980 = vld [vmem:[%s5 + $0x6c] sm:$0xf]
  %v981 = vld [vmem:[%s5 + $0x70] sm:$0xf]
  %v982 = vld [vmem:[%s5 + $0x74] sm:$0xf]
  %v983 = vld [vmem:[%s5 + $0x78] sm:$0xf]
  %v984 = vld [vmem:[%s5 + $0x7c] sm:$0xf]
  %v985 = vlaneseq
  %v986 = vshrl.u32 %v985, 7
  %v987 = vsub.s32 1, %v986
  %v988 = vrot.slane %v860, %v987
  %v1021 = vunpack.c.l.b16 %v953
  %v1022 = vunpack.c.l.b16 %v954
  %v1023 = vunpack.c.l.b16 %v955
  %v1024 = vunpack.c.l.b16 %v956
  %v1025 = vunpack.c.l.b16 %v957
  %v1026 = vunpack.c.l.b16 %v958
  %v1027 = vunpack.c.l.b16 %v959
  %v1028 = vunpack.c.l.b16 %v960
  %v1029 = vunpack.c.l.b16 %v961
  %v1030 = vunpack.c.l.b16 %v962
  %v1031 = vunpack.c.l.b16 %v963
  %v1032 = vunpack.c.l.b16 %v964
  %v1033 = vunpack.c.l.b16 %v965
  %v1034 = vunpack.c.l.b16 %v966
  %v1035 = vunpack.c.l.b16 %v967
  %v1036 = vunpack.c.l.b16 %v968
  %v1037 = vunpack.c.l.b16 %v969
  %v1038 = vunpack.c.l.b16 %v970
  %v1039 = vunpack.c.l.b16 %v971
  %v1040 = vunpack.c.l.b16 %v972
  %v1041 = vunpack.c.l.b16 %v973
  %v1042 = vunpack.c.l.b16 %v974
  %v1043 = vunpack.c.l.b16 %v975
  %v1044 = vunpack.c.l.b16 %v976
  %v1045 = vunpack.c.l.b16 %v977
  %v1046 = vunpack.c.l.b16 %v978
  %v1047 = vunpack.c.l.b16 %v979
  %v1048 = vunpack.c.l.b16 %v980
  %v1049 = vunpack.c.l.b16 %v981
  %v1050 = vunpack.c.l.b16 %v982
  %v1051 = vunpack.c.l.b16 %v983
  %v1052 = vunpack.c.l.b16 %v984
  %v1053 = vpack.c.b16 %v1022, %v1021
  %v1054 = vpack.c.b16 %v1024, %v1023
  %v1055 = vpack.c.b16 %v1026, %v1025
  %v1056 = vpack.c.b16 %v1028, %v1027
  %v1057 = vpack.c.b16 %v1030, %v1029
  %v1058 = vpack.c.b16 %v1032, %v1031
  %v1059 = vpack.c.b16 %v1034, %v1033
  %v1060 = vpack.c.b16 %v1036, %v1035
  %v1061 = vpack.c.b16 %v1038, %v1037
  %v1062 = vpack.c.b16 %v1040, %v1039
  %v1063 = vpack.c.b16 %v1042, %v1041
  %v1064 = vpack.c.b16 %v1044, %v1043
  %v1065 = vpack.c.b16 %v1046, %v1045
  %v1066 = vpack.c.b16 %v1048, %v1047
  %v1067 = vpack.c.b16 %v1050, %v1049
  %v1068 = vpack.c.b16 %v1052, %v1051
  %1085 = vmatprep.subr.bf16.mxu0 0
  %1086 = vmatpush1.bf16.msra.mxu0 %v1053
  %1087 = vmatprep.subr.bf16.mxu0 0
  %1088 = vmatpush1.bf16.msra.mxu0 %v1054
  %1089 = vmatprep.subr.bf16.mxu0 0
  %1090 = vmatpush1.bf16.msra.mxu0 %v1055
  %1091 = vmatprep.subr.bf16.mxu0 0
  %1092 = vmatpush1.bf16.msra.mxu0 %v1056
  %1093 = vmatprep.subr.bf16.mxu0 0
  %1094 = vmatpush1.bf16.msra.mxu0 %v1057
  %1095 = vmatprep.subr.bf16.mxu0 0
  %1096 = vmatpush1.bf16.msra.mxu0 %v1058
  %1097 = vmatprep.subr.bf16.mxu0 0
  %1098 = vmatpush1.bf16.msra.mxu0 %v1059
  %1099 = vmatprep.subr.bf16.mxu0 0
  %1100 = vmatpush1.bf16.msra.mxu0 %v1060
  %1101 = vmatprep.subr.bf16.mxu0 0
  %1102 = vmatpush1.bf16.msra.mxu0 %v1061
  %1103 = vmatprep.subr.bf16.mxu0 0
  %1104 = vmatpush1.bf16.msra.mxu0 %v1062
  %1105 = vmatprep.subr.bf16.mxu0 0
  %1106 = vmatpush1.bf16.msra.mxu0 %v1063
  %1107 = vmatprep.subr.bf16.mxu0 0
  %1108 = vmatpush1.bf16.msra.mxu0 %v1064
  %1109 = vmatprep.subr.bf16.mxu0 0
  %1110 = vmatpush1.bf16.msra.mxu0 %v1065
  %1111 = vmatprep.subr.bf16.mxu0 0
  %1112 = vmatpush1.bf16.msra.mxu0 %v1066
  %1113 = vmatprep.subr.bf16.mxu0 0
  %1114 = vmatpush1.bf16.msra.mxu0 %v1067
  %1115 = vmatprep.subr.bf16.mxu0 0
  %1116 = vmatpush1.bf16.msra.mxu0 %v1068
  %1117 = vmatprep.mubr.bf16.mxu0 %v952
  %1118 = vmatmul.mubr.bf16.gmra.mrb[0].mxu0 %v951
  %v1119 = vpop.f32.mrb[0].mxu0
  %v1120 = vadd.f32 %v988, %v1119
  %v1121 = vpop.f32.mrb[0].mxu0
  %v1122 = vpop.f32.mrb[0].mxu0
  %v1123 = vadd.f32 %v988, %v1122
  %v1124 = vpop.f32.mrb[0].mxu0
  %1125 = vdwg.mxu0
  %v1126 = vmax.f32 %v1120, 0.0
  %v1127 = vmax.f32 %v1123, 0.0
  %v1128 = vpack.c.bf16 %v1127, %v1126
  %v1129 = vld [vmem:[%s6] sm:$0xf]
  %v1130 = vld [vmem:[%s6 + $0x4] sm:$0xf]
  %v1131 = vld [vmem:[%s6 + $0x8] sm:$0xf]
  %v1132 = vld [vmem:[%s6 + $0xc] sm:$0xf]
  %v1133 = vld [vmem:[%s6 + $0x10] sm:$0xf]
  %v1134 = vld [vmem:[%s6 + $0x14] sm:$0xf]
  %v1135 = vld [vmem:[%s6 + $0x18] sm:$0xf]
  %v1136 = vld [vmem:[%s6 + $0x1c] sm:$0xf]
  %v1137 = vld [vmem:[%s6 + $0x20] sm:$0xf]
  %v1138 = vld [vmem:[%s6 + $0x24] sm:$0xf]
  %v1139 = vld [vmem:[%s6 + $0x28] sm:$0xf]
  %v1140 = vld [vmem:[%s6 + $0x2c] sm:$0xf]
  %v1141 = vld [vmem:[%s6 + $0x30] sm:$0xf]
  %v1142 = vld [vmem:[%s6 + $0x34] sm:$0xf]
  %v1143 = vld [vmem:[%s6 + $0x38] sm:$0xf]
  %v1144 = vld [vmem:[%s6 + $0x3c] sm:$0xf]
  %v1145 = vlaneseq
  %v1146 = vshrl.u32 %v1145, 7
  %v1147 = vsub.s32 2, %v1146
  %v1148 = vrot.slane %v860, %v1147
  %v1165 = vunpack.c.l.b16 %v1129
  %v1166 = vunpack.c.l.b16 %v1130
  %v1167 = vunpack.c.l.b16 %v1131
  %v1168 = vunpack.c.l.b16 %v1132
  %v1169 = vunpack.c.l.b16 %v1133
  %v1170 = vunpack.c.l.b16 %v1134
  %v1171 = vunpack.c.l.b16 %v1135
  %v1172 = vunpack.c.l.b16 %v1136
  %v1173 = vunpack.c.l.b16 %v1137
  %v1174 = vunpack.c.l.b16 %v1138
  %v1175 = vunpack.c.l.b16 %v1139
  %v1176 = vunpack.c.l.b16 %v1140
  %v1177 = vunpack.c.l.b16 %v1141
  %v1178 = vunpack.c.l.b16 %v1142
  %v1179 = vunpack.c.l.b16 %v1143
  %v1180 = vunpack.c.l.b16 %v1144
  %v1181 = vpack.c.b16 %v1166, %v1165
  %v1182 = vpack.c.b16 %v1168, %v1167
  %v1183 = vpack.c.b16 %v1170, %v1169
  %v1184 = vpack.c.b16 %v1172, %v1171
  %v1185 = vpack.c.b16 %v1174, %v1173
  %v1186 = vpack.c.b16 %v1176, %v1175
  %v1187 = vpack.c.b16 %v1178, %v1177
  %v1188 = vpack.c.b16 %v1180, %v1179
  %1197 = vmatprep.subr.bf16.mxu0 0
  %1198 = vmatpush1.bf16.msra.mxu0 %v1181
  %1199 = vmatprep.subr.bf16.mxu0 0
  %1200 = vmatpush1.bf16.msra.mxu0 %v1182
  %1201 = vmatprep.subr.bf16.mxu0 0
  %1202 = vmatpush1.bf16.msra.mxu0 %v1183
  %1203 = vmatprep.subr.bf16.mxu0 0
  %1204 = vmatpush1.bf16.msra.mxu0 %v1184
  %1205 = vmatprep.subr.bf16.mxu0 0
  %1206 = vmatpush1.bf16.msra.mxu0 %v1185
  %1207 = vmatprep.subr.bf16.mxu0 0
  %1208 = vmatpush1.bf16.msra.mxu0 %v1186
  %1209 = vmatprep.subr.bf16.mxu0 0
  %1210 = vmatpush1.bf16.msra.mxu0 %v1187
  %1211 = vmatprep.subr.bf16.mxu0 0
  %1212 = vmatpush1.bf16.msra.mxu0 %v1188
  %1213 = vmatprep.subr.bf16.mxu0 0
  %1214 = vmatpush1.bf16.msra.mxu0 0
  %1215 = vmatprep.subr.bf16.mxu0 0
  %1216 = vmatpush1.bf16.msra.mxu0 0
  %1217 = vmatprep.subr.bf16.mxu0 0
  %1218 = vmatpush1.bf16.msra.mxu0 0
  %1219 = vmatprep.subr.bf16.mxu0 0
  %1220 = vmatpush1.bf16.msra.mxu0 0
  %1221 = vmatprep.subr.bf16.mxu0 0
  %1222 = vmatpush1.bf16.msra.mxu0 0
  %1223 = vmatprep.subr.bf16.mxu0 0
  %1224 = vmatpush1.bf16.msra.mxu0 0
  %1225 = vmatprep.subr.bf16.mxu0 0
  %1226 = vmatpush1.bf16.msra.mxu0 0
  %1227 = vmatprep.subr.bf16.mxu0 0
  %1228 = vmatpush1.bf16.msra.mxu0 0
  %1229 = vmatprep.mubr.bf16.mxu0 0
  %1230 = vmatmul.mubr.bf16.gmra.mrb[0].mxu0 %v1128
  %v1231 = vpop.f32.mrb[0].mxu0
  %v1232 = vadd.f32 %v1148, %v1231
  %v1233 = vpop.f32.mrb[0].mxu0
  %v1234 = vpop.f32.mrb[0].mxu0
  %v1235 = vadd.f32 %v1148, %v1234
  %v1236 = vpop.f32.mrb[0].mxu0
  %1237 = vdwg.mxu0
  %v1238 = vmax.f32 %v1232, 0.0
  %v1239 = vmax.f32 %v1235, 0.0
  %v1240 = vadd.f32 %v1238, %v854
  %v1241 = vadd.f32 %v1239, %v855
  %v1242 = vadd.f32 %v1240, %v856
  %v1243 = vadd.f32 %v1241, %v857
  %v1244 = vadd.f32 %v1242, %v858
  %v1245 = vadd.f32 %v1243, %v859
  %vm1246 = vcmask 523264
  %1247 = vst.msk [vmem:[%s8] sm:$0xff] %vm1246, %v1244
  %1248 = vst.msk [vmem:[%s8 + $0x10] sm:$0xff] %vm1246, %v1245
  %1251 = vrot.lane.b32.xlu0 %v854, 64
  %v1252 = vpop.permute.xlu0 %1251
  %1253 = vrot.lane.b32.xlu0 %v855, 64
  %v1254 = vpop.permute.xlu0 %1253
  %vm1257 = vcmask 1048064
  %1258 = vst.msk [vmem:[%s8] sm:$0xff] %vm1257, %v1252
  %1259 = vst.msk [vmem:[%s8 + $0x10] sm:$0xff] %vm1257, %v1254
  %1260 = vst.msk [vmem:[%s8 + $0x8] sm:$0xff] %vm1246, %v856
  %1261 = vst.msk [vmem:[%s8 + $0x18] sm:$0xff] %vm1246, %v857
  %1264 = vrot.lane.b32.xlu0 %v858, 64
  %v1265 = vpop.permute.xlu0 %1264
  %1266 = vrot.lane.b32.xlu0 %v859, 64
  %v1267 = vpop.permute.xlu0 %1266
  %1270 = vst.msk [vmem:[%s8 + $0x8] sm:$0xff] %vm1257, %v1265
  %1271 = vst.msk [vmem:[%s8 + $0x18] sm:$0xff] %vm1257, %v1267
  // Predicated region
  $region34: #{sub_model_forward.1} parent=0 // pred_check
    _
  $region35: #{sub_model_forward.1} parent=0 // pred_check_branch
    %1273 = sbr.rel (0) target = $region37
  $region36: #{sub_model_forward.1} parent=0 // pred_region
    _
  $region37: #{sub_model_forward.1} parent=0 // pred_fallthru
    _
  // Predicated region
  $region38: #{sub_model_forward.1} parent=0 // pred_check
    _
  $region39: #{sub_model_forward.1} parent=0 // pred_check_branch
    %1275 = sbr.rel (0) target = $region41
  $region40: #{sub_model_forward.1} parent=0 // pred_region
    _
  $region41: #{sub_model_forward.1} parent=0 // pred_fallthru
    _

</llo_original>
